<compile_context>
chip_gen: v5e
topology: v5e:2x2
jax: 0.10.0
libtpu: 0.0.40
codegen_flags: <defaults>
</compile_context>

<pallas_src>
import jax
import jax.numpy as jnp
from jax import lax
from jax.experimental import pallas as pl
from jax.experimental.pallas import tpu as pltpu


def _round_up(x, m):
    return ((x + m - 1) // m) * m


def upmix_kernel(p_ref, w_ref, x_ref, bias_ref, alpha_ref, o_ref):
    # p_ref:    (K, tm)  bf16 im2col patches (channel-major, spatial in lanes)
    # w_ref:    (c, K)   bf16 beta-folded phase weights
    # x_ref:    (c, tm)  skip input tile (same phase / same spatial tile)
    # bias_ref: (c, 1)   f32 beta-folded bias
    # alpha_ref:(c, 1)   f32 PReLU slope
    # o_ref:    (c, tm)  lane-dense output tile
    y = jnp.dot(w_ref[...], p_ref[...], preferred_element_type=jnp.float32)
    y = y + bias_ref[...] + x_ref[...].astype(jnp.float32)
    o_ref[...] = jnp.where(y >= 0, y, alpha_ref[...] * y).astype(o_ref.dtype)


def upmix_forward(x, x_deep, t, weight, bias, beta, alpha, *, tm_target=1024):
    """x: (N, c, 2H, 2W) NCHW skip, x_deep: (N, cd, H, W) NCHW,
    weight: (cd, c, 4, 4) (ConvTranspose2d layout), bias: (c,),
    beta: (1, c, 1, 1), alpha: (c,) PReLU slope.  t is unused (as in the module)."""
    del t
    N, cd, H, W = x_deep.shape
    c = weight.shape[1]
    HW = H * W
    K = 4 * cd
    compute_dtype = jnp.bfloat16

    # Fold beta into weights/bias (per output channel).
    beta_c = beta.reshape(c)
    w_eff = weight * beta_c[None, :, None, None]              # (cd, c, 4, 4)
    bias_eff = (bias * beta_c).reshape(c, 1).astype(jnp.float32)
    alpha2 = alpha.reshape(c, 1).astype(jnp.float32)

    # Spatial tile size: multiple of 128 (lane-dense), capped by tm_target.
    tm = min(tm_target, _round_up(HW, 128))
    HWp = _round_up(HW, tm)

    # Zero halo of 1 around the deep feature map (NCHW, channel-major kept).
    xpad = jnp.pad(x_deep, ((0, 0), (0, 0), (1, 1), (1, 1)))  # (N, cd, H+2, W+2)

    # ho = 2*hi - 1 + kh  =>  even output rows use taps (pad_off, kh) = (0,3),(1,1)
    #                          odd  output rows use taps (1,2),(2,0)   (same for cols)
    taps = {0: ((0, 3), (1, 1)), 1: ((1, 2), (2, 0))}

    x6 = x.reshape(N, c, H, 2, W, 2)                          # phase view of the skip

    patches_list, w_list, skip_list = [], [], []
    for dy in (0, 1):
        for dx in (0, 1):
            pats, ws = [], []
            for (a, kh) in taps[dy]:
                for (b, kw) in taps[dx]:
                    pats.append(xpad[:, :, a:a + H, b:b + W])     # (N, cd, H, W)
                    ws.append(w_eff[:, :, kh, kw])                # (cd, c)
            patches_list.append(
                jnp.concatenate(pats, axis=1).reshape(N, K, HW))  # (N, K, HW)
            w_list.append(jnp.concatenate(ws, axis=0))            # (K, c)
            skip_list.append(x6[:, :, :, dy, :, dx].reshape(N, c, HW))

    patches = jnp.stack(patches_list).astype(compute_dtype)       # (4, N, K, HW)
    wT = jnp.stack(w_list).transpose(0, 2, 1).astype(compute_dtype)  # (4, c, K)
    skip = jnp.stack(skip_list)                                    # (4, N, c, HW)

    if HWp != HW:
        patches = jnp.pad(patches, ((0, 0), (0, 0), (0, 0), (0, HWp - HW)))
        skip = jnp.pad(skip, ((0, 0), (0, 0), (0, 0), (0, HWp - HW)))

    grid = (4, N, HWp // tm)

    out_ph = pl.pallas_call(
        upmix_kernel,
        out_shape=jax.ShapeDtypeStruct((4, N, c, HWp), x.dtype),
        grid=grid,
        in_specs=[
            pl.BlockSpec((None, None, K, tm), lambda p, n, m: (p, n, 0, m)),
            pl.BlockSpec((None, c, K), lambda p, n, m: (p, 0, 0)),
            pl.BlockSpec((None, None, c, tm), lambda p, n, m: (p, n, 0, m)),
            pl.BlockSpec((c, 1), lambda p, n, m: (0, 0)),
            pl.BlockSpec((c, 1), lambda p, n, m: (0, 0)),
        ],
        out_specs=pl.BlockSpec((None, None, c, tm), lambda p, n, m: (p, n, 0, m)),
        compiler_params=pltpu.CompilerParams(
            dimension_semantics=("parallel", "parallel", "parallel"),
            vmem_limit_bytes=32 * 1024 * 1024),
    )(patches, wT, skip, bias_eff, alpha2)

    # Drop spatial padding, re-interleave the 4 phases into (N, c, 2H, 2W).
    out_ph = out_ph[..., :HW]                                      # (4, N, c, HW)
    y = out_ph.reshape(2, 2, N, c, H, W).transpose(2, 3, 4, 0, 5, 1)  # (N,c,H,2,W,2)
    return y.reshape(N, c, 2 * H, 2 * W)


def upmix_reference(x, x_deep, weight, bias, beta, alpha):
    """Pure-JAX f32 reference matching torch semantics (ConvTranspose2d via dilated conv)."""
    w_flip = jnp.flip(weight, axis=(2, 3)).transpose(1, 0, 2, 3)   # (c, cd, 4, 4) OIHW
    conv = lax.conv_general_dilated(
        x_deep, w_flip, window_strides=(1, 1), padding=((2, 2), (2, 2)),
        lhs_dilation=(2, 2), dimension_numbers=('NCHW', 'OIHW', 'NCHW'))
    conv = conv + bias.reshape(1, -1, 1, 1)
    y = conv * beta + x
    a = alpha.reshape(1, -1, 1, 1)
    return jnp.where(y >= 0, y, a * y)


if __name__ == "__main__":
    key = jax.random.PRNGKey(0)
    k1, k2, k3, k4, k5 = jax.random.split(key, 5)

    N, c, cd, H, W = 2, 4, 8, 8, 8          # x_deep spatial 8 -> output spatial 16

    x = jax.random.normal(k1, (N, c, 2 * H, 2 * W), dtype=jnp.float32)
    x_deep = jax.random.normal(k2, (N, cd, H, W), dtype=jnp.float32)
    t = jax.random.normal(k3, (N,), dtype=jnp.float32)   # unused by forward, kept for signature

    # Deterministic parameter init (synthetic, matching module __init__ shapes).
    weight = 0.1 * jax.random.normal(k4, (cd, c, 4, 4), dtype=jnp.float32)  # ConvTranspose2d weight
    bias = 0.1 * jax.random.normal(k5, (c,), dtype=jnp.float32)             # ConvTranspose2d bias
    beta = jnp.ones((1, c, 1, 1), dtype=jnp.float32)                        # nn.Parameter(ones)
    alpha = jnp.full((c,), 0.2, dtype=jnp.float32)                          # PReLU(c, 0.2)

    out = jax.jit(upmix_forward)(x, x_deep, t, weight, bias, beta, alpha)
    out = jax.block_until_ready(out)

    ref = upmix_reference(x, x_deep, weight, bias, beta, alpha)
    assert out.shape == (N, c, 2 * H, 2 * W)
    # bf16 matmul operands -> loosened tolerance vs f32 reference.
    assert jnp.allclose(out, ref, atol=3e-2, rtol=3e-2), float(jnp.max(jnp.abs(out - ref)))

    print("KERNEL_OK")
</pallas_src>

<mosaic_0001>
module attributes {stable_mosaic.version = 11 : i64} {
  func.func @upmix_kernel(%arg0: i32, %arg1: i32, %arg2: i32, %arg3: memref<1x1x32x128xbf16, #tpu.memory_space<vmem>>, %arg4: memref<1x4x32xbf16, #tpu.memory_space<vmem>>, %arg5: memref<1x1x4x128xf32, #tpu.memory_space<vmem>>, %arg6: memref<4x1xf32, #tpu.memory_space<vmem>>, %arg7: memref<4x1xf32, #tpu.memory_space<vmem>>, %arg8: memref<1x1x4x128xf32, #tpu.memory_space<vmem>>) attributes {dimension_semantics = [#tpu.dimension_semantics<parallel>, #tpu.dimension_semantics<parallel>, #tpu.dimension_semantics<parallel>], iteration_bounds = array<i64: 4, 2, 1>, scalar_prefetch = 0 : i64, scratch_operands = 0 : i64, tpu.core_type = #tpu.core_type<tc>, window_params = [{transform_indices = @transform_0, window_bounds = array<i64: 1, 1, 32, 128>}, {transform_indices = @transform_1, window_bounds = array<i64: 1, 4, 32>}, {transform_indices = @transform_2, window_bounds = array<i64: 1, 1, 4, 128>}, {pipeline_mode = #tpu.pipeline_mode<synchronous>, transform_indices = @transform_3, window_bounds = array<i64: 4, 1>}, {pipeline_mode = #tpu.pipeline_mode<synchronous>, transform_indices = @transform_4, window_bounds = array<i64: 4, 1>}, {transform_indices = @transform_5, window_bounds = array<i64: 1, 1, 4, 128>}]} {
    %c0 = arith.constant 0 : index
    %c0_0 = arith.constant 0 : index
    %c0_1 = arith.constant 0 : index
    %0 = vector.load %arg4[%c0, %c0_0, %c0_1] : memref<1x4x32xbf16, #tpu.memory_space<vmem>>, vector<1x4x32xbf16>
    %1 = vector.shape_cast %0 : vector<1x4x32xbf16> to vector<4x32xbf16>
    %c0_2 = arith.constant 0 : index
    %c0_3 = arith.constant 0 : index
    %c0_4 = arith.constant 0 : index
    %c0_5 = arith.constant 0 : index
    %2 = vector.load %arg3[%c0_2, %c0_3, %c0_4, %c0_5] : memref<1x1x32x128xbf16, #tpu.memory_space<vmem>>, vector<1x1x32x128xbf16>
    %3 = vector.shape_cast %2 : vector<1x1x32x128xbf16> to vector<32x128xbf16>
    %cst = arith.constant dense<0.000000e+00> : vector<4x128xf32>
    %4 = tpu.matmul %1, %3, %cst {dimension_numbers = #tpu.dot_dimension_numbers<[1], [0], [0], [1], [0, 0, 1, 1], [], []>} : vector<4x32xbf16>, vector<32x128xbf16>, vector<4x128xf32> -> vector<4x128xf32>
    %c0_6 = arith.constant 0 : index
    %c0_7 = arith.constant 0 : index
    %5 = vector.load %arg6[%c0_6, %c0_7] : memref<4x1xf32, #tpu.memory_space<vmem>>, vector<4x1xf32>
    %6 = vector.broadcast %5 : vector<4x1xf32> to vector<4x128xf32>
    %7 = arith.addf %4, %6 : vector<4x128xf32>
    %c0_8 = arith.constant 0 : index
    %c0_9 = arith.constant 0 : index
    %c0_10 = arith.constant 0 : index
    %c0_11 = arith.constant 0 : index
    %8 = vector.load %arg5[%c0_8, %c0_9, %c0_10, %c0_11] : memref<1x1x4x128xf32, #tpu.memory_space<vmem>>, vector<1x1x4x128xf32>
    %9 = vector.shape_cast %8 : vector<1x1x4x128xf32> to vector<4x128xf32>
    %10 = arith.addf %7, %9 : vector<4x128xf32>
    %cst_12 = arith.constant 0.000000e+00 : f32
    %11 = vector.broadcast %cst_12 : f32 to vector<4x128xf32>
    %12 = arith.cmpf oge, %10, %11 : vector<4x128xf32>
    %c0_13 = arith.constant 0 : index
    %c0_14 = arith.constant 0 : index
    %13 = vector.load %arg7[%c0_13, %c0_14] : memref<4x1xf32, #tpu.memory_space<vmem>>, vector<4x1xf32>
    %14 = vector.broadcast %13 : vector<4x1xf32> to vector<4x128xf32>
    %15 = arith.mulf %14, %10 : vector<4x128xf32>
    %16 = arith.select %12, %10, %15 : vector<4x128xi1>, vector<4x128xf32>
    %c0_15 = arith.constant 0 : index
    %c0_16 = arith.constant 0 : index
    %c0_17 = arith.constant 0 : index
    %c0_18 = arith.constant 0 : index
    %17 = vector.load %arg8[%c0_15, %c0_16, %c0_17, %c0_18] : memref<1x1x4x128xf32, #tpu.memory_space<vmem>>, vector<1x1x4x128xf32>
    %18 = vector.shape_cast %17 : vector<1x1x4x128xf32> to vector<4x128xf32>
    %19 = vector.shape_cast %16 : vector<4x128xf32> to vector<1x1x4x128xf32>
    tpu.vector_store %arg8[%c0_15, %c0_16, %c0_17, %c0_18], %19 {strides = array<i32>} : memref<1x1x4x128xf32, #tpu.memory_space<vmem>>, vector<1x1x4x128xf32>,
    return
  }
  func.func @transform_0(%arg0: i32, %arg1: i32, %arg2: i32) -> (i32, i32, i32, i32) {
    %c0_i32 = arith.constant 0 : i32
    %c0_i32_0 = arith.constant 0 : i32
    return %arg0, %arg1, %c0_i32, %arg2 : i32, i32, i32, i32
  }
  func.func @transform_1(%arg0: i32, %arg1: i32, %arg2: i32) -> (i32, i32, i32) {
    %c0_i32 = arith.constant 0 : i32
    %c0_i32_0 = arith.constant 0 : i32
    %c0_i32_1 = arith.constant 0 : i32
    return %arg0, %c0_i32, %c0_i32_0 : i32, i32, i32
  }
  func.func @transform_2(%arg0: i32, %arg1: i32, %arg2: i32) -> (i32, i32, i32, i32) {
    %c0_i32 = arith.constant 0 : i32
    %c0_i32_0 = arith.constant 0 : i32
    return %arg0, %arg1, %c0_i32, %arg2 : i32, i32, i32, i32
  }
  func.func @transform_3(%arg0: i32, %arg1: i32, %arg2: i32) -> (i32, i32) {
    %c0_i32 = arith.constant 0 : i32
    %c0_i32_0 = arith.constant 0 : i32
    %c0_i32_1 = arith.constant 0 : i32
    return %c0_i32, %c0_i32_0 : i32, i32
  }
  func.func @transform_4(%arg0: i32, %arg1: i32, %arg2: i32) -> (i32, i32) {
    %c0_i32 = arith.constant 0 : i32
    %c0_i32_0 = arith.constant 0 : i32
    %c0_i32_1 = arith.constant 0 : i32
    return %c0_i32, %c0_i32_0 : i32, i32
  }
  func.func @transform_5(%arg0: i32, %arg1: i32, %arg2: i32) -> (i32, i32, i32, i32) {
    %c0_i32 = arith.constant 0 : i32
    %c0_i32_0 = arith.constant 0 : i32
    return %arg0, %arg1, %c0_i32, %arg2 : i32, i32, i32, i32
  }
}

</mosaic_0001>

<llo_original>
// kernel: upmix_forward.1
$region0: #{upmix_forward.1}
  #allocation0 [shape = 'u32[]', space=smem, size = 0x4, offset = 0x4, fixed_abs, tag = 'smem constant byte address 0x4 - core index']
  #allocation1 [shape = 'u32[72,128]{1,0:T(1,128)}', space=vmem, size = 0x9000, scoped, tag = 'internal scratch']
  %s0 = inlined_call_operand.vmem [shape: bf16[4,2,32,128], index: 0, kind: input, shape index: {}]
  %s1 = inlined_call_operand.vmem [shape: bf16[4,4,32], index: 1, kind: input, shape index: {}]
  %s2 = inlined_call_operand.vmem [shape: f32[4,2,4,128], index: 2, kind: input, shape index: {}]
  %s3 = inlined_call_operand.vmem [shape: f32[4,1], index: 3, kind: input, shape index: {}]
  %s4 = inlined_call_operand.vmem [shape: f32[4,1], index: 4, kind: input, shape index: {}]
  %s5 = inlined_call_operand.vmem [shape: f32[4,2,4,128], index: 5, kind: output, shape index: {}]
  %s6 = sld [smem:[#allocation0]]
  $region53: #{upmix_forward.1} parent=0
    _
  %s8 = ssub.s32 1, %s6
  %s9 = scalar_select 0, %s8, %s6
  loop: start=0, step=1, limit=10
  $region2: #{upmix_forward.1} parent=0 // loop_pre_header
    _
  $region3: #{upmix_forward.1} parent=0 // loop_header
    %s11 = sphi 0, %s15
    %p12 = scmp.ge.s32.totalorder %s11, 10
    %s18 = sphi 0, %s37
    %s19 = sphi 0, %s33
    %s20 = sphi 0, %s29
    %s21 = sphi 0, %s18
    %s22 = sphi 0, %s19
    %s23 = sphi 0, %s20
    %s24 = sphi 0, %s21
    %s25 = sphi 0, %s22
    %s26 = sphi 0, %s23
    %s44 = sphi 0, %s46
    %s47 = sphi 0, %s44
    %s48 = sphi 0, %s47
    %s64 = sphi 0, %s48
    %s70 = sphi 0, %s72
    %s73 = sphi 0, %s70
    %s74 = sphi 0, %s73
    %s90 = sphi 0, %s74
    %s100 = sphi 0, %s102
    %s103 = sphi 0, %s100
    %s104 = sphi 0, %s103
    %s120 = sphi 0, %s104
    %s124 = sphi 0, %s124
    %s126 = sphi 0, %s124
    %s127 = sphi 0, %s126
    %s141 = sphi 0, %s127
    %s145 = sphi 0, %s145
    %s147 = sphi 0, %s145
    %s148 = sphi 0, %s147
    %s162 = sphi 0, %s148
    %s172 = sphi 0, %s174
    %s175 = sphi 0, %s172
    %s176 = sphi 0, %s175
    %s192 = sphi 0, %s176
  $region4: #{upmix_forward.1} parent=0 // loop_header_branch
    %14 = sbr.rel (%p12) target = $region8
  $region5: #{upmix_forward.1} parent=0 // loop_body
    %s16 = ssub.s32 %s11, 1
    %s17 = ssub.s32 %s11, 2
    %s27 = sadd.s32 1, %s20
    %p28 = scmp.ge.s32.totalorder %s27, 1
    %s29 = scalar_select %p28, 0, %s27
    %s30 = sadd.s32 1, %s19
    %s31 = scalar_select %p28, %s30, %s19
    %p32 = scmp.ge.s32.totalorder %s31, 2
    %s33 = scalar_select %p32, 0, %s31
    %s34 = sadd.s32 1, %s18
    %s35 = scalar_select %p32, %s34, %s18
    %p36 = scmp.ge.s32.totalorder %s35, 4
    %s37 = scalar_select %p36, 0, %s35
    %s38 = ssub.s32 %s18, %s37
    %s39 = ssub.s32 %s19, %s33
    %s40 = sor.u32 %s38, %s39
    %s41 = ssub.s32 %s20, %s29
    %s42 = sor.u32 %s40, %s41
    %p43 = scmp.eq.s32.totalorder %s42, 0
    %s45 = sadd.s32 %s44, 1
    %s46 = scalar_select %p43, %s44, %s45
    %p49 = pneg %p43
    %p50 = scmp.eq.s32.totalorder %s11, 7
    %p51 = por %p49, %p50
    %p52 = scmp.ne.s32.totalorder %s44, %s47
    %p53 = scmp.eq.s32.totalorder %s11, 0
    %p54 = por %p52, %p53
    %p55 = scmp.ne.s32.totalorder %s44, %s47
    %p56 = scmp.eq.s32.totalorder %s16, 7
    %p57 = por %p55, %p56
    %p58 = scmp.ne.s32.totalorder %s47, %s48
    %p59 = scmp.eq.s32.totalorder %s16, 0
    %p60 = por %p58, %p59
    %p61 = scmp.ne.s32.totalorder %s47, %s48
    %p62 = scmp.eq.s32.totalorder %s17, 7
    %p63 = por %p61, %p62
    %p65 = scmp.ne.s32.totalorder %s48, %s64
    %p66 = scmp.eq.s32.totalorder %s17, 0
    %p67 = por %p65, %p66
    %s68 = ssub.s32 %s18, %s37
    %p69 = scmp.eq.s32.totalorder %s68, 0
    %s71 = sadd.s32 %s70, 1
    %s72 = scalar_select %p69, %s70, %s71
    %p75 = pneg %p69
    %p76 = scmp.eq.s32.totalorder %s11, 7
    %p77 = por %p75, %p76
    %p78 = scmp.ne.s32.totalorder %s70, %s73
    %p79 = scmp.eq.s32.totalorder %s11, 0
    %p80 = por %p78, %p79
    %p81 = scmp.ne.s32.totalorder %s70, %s73
    %p82 = scmp.eq.s32.totalorder %s16, 7
    %p83 = por %p81, %p82
    %p84 = scmp.ne.s32.totalorder %s73, %s74
    %p85 = scmp.eq.s32.totalorder %s16, 0
    %p86 = por %p84, %p85
    %p87 = scmp.ne.s32.totalorder %s73, %s74
    %p88 = scmp.eq.s32.totalorder %s17, 7
    %p89 = por %p87, %p88
    %p91 = scmp.ne.s32.totalorder %s74, %s90
    %p92 = scmp.eq.s32.totalorder %s17, 0
    %p93 = por %p91, %p92
    %s94 = ssub.s32 %s18, %s37
    %s95 = ssub.s32 %s19, %s33
    %s96 = sor.u32 %s94, %s95
    %s97 = ssub.s32 %s20, %s29
    %s98 = sor.u32 %s96, %s97
    %p99 = scmp.eq.s32.totalorder %s98, 0
    %s101 = sadd.s32 %s100, 1
    %s102 = scalar_select %p99, %s100, %s101
    %p105 = pneg %p99
    %p106 = scmp.eq.s32.totalorder %s11, 7
    %p107 = por %p105, %p106
    %p108 = scmp.ne.s32.totalorder %s100, %s103
    %p109 = scmp.eq.s32.totalorder %s11, 0
    %p110 = por %p108, %p109
    %p111 = scmp.ne.s32.totalorder %s100, %s103
    %p112 = scmp.eq.s32.totalorder %s16, 7
    %p113 = por %p111, %p112
    %p114 = scmp.ne.s32.totalorder %s103, %s104
    %p115 = scmp.eq.s32.totalorder %s16, 0
    %p116 = por %p114, %p115
    %p117 = scmp.ne.s32.totalorder %s103, %s104
    %p118 = scmp.eq.s32.totalorder %s17, 7
    %p119 = por %p117, %p118
    %p121 = scmp.ne.s32.totalorder %s104, %s120
    %p122 = scmp.eq.s32.totalorder %s17, 0
    %p123 = por %p121, %p122
    %s125 = sadd.s32 %s124, 1
    %p128 = scmp.eq.s32.totalorder %s11, 7
    %p129 = scmp.ne.s32.totalorder %s124, %s126
    %p130 = scmp.eq.s32.totalorder %s11, 0
    %p131 = por %p129, %p130
    %p132 = scmp.ne.s32.totalorder %s124, %s126
    %p133 = scmp.eq.s32.totalorder %s16, 7
    %p134 = por %p132, %p133
    %p135 = scmp.ne.s32.totalorder %s126, %s127
    %p136 = scmp.eq.s32.totalorder %s16, 0
    %p137 = por %p135, %p136
    %p138 = scmp.ne.s32.totalorder %s126, %s127
    %p139 = scmp.eq.s32.totalorder %s17, 7
    %p140 = por %p138, %p139
    %p142 = scmp.ne.s32.totalorder %s127, %s141
    %p143 = scmp.eq.s32.totalorder %s17, 0
    %p144 = por %p142, %p143
    %s146 = sadd.s32 %s145, 1
    %p149 = scmp.eq.s32.totalorder %s11, 7
    %p150 = scmp.ne.s32.totalorder %s145, %s147
    %p151 = scmp.eq.s32.totalorder %s11, 0
    %p152 = por %p150, %p151
    %p153 = scmp.ne.s32.totalorder %s145, %s147
    %p154 = scmp.eq.s32.totalorder %s16, 7
    %p155 = por %p153, %p154
    %p156 = scmp.ne.s32.totalorder %s147, %s148
    %p157 = scmp.eq.s32.totalorder %s16, 0
    %p158 = por %p156, %p157
    %p159 = scmp.ne.s32.totalorder %s147, %s148
    %p160 = scmp.eq.s32.totalorder %s17, 7
    %p161 = por %p159, %p160
    %p163 = scmp.ne.s32.totalorder %s148, %s162
    %p164 = scmp.eq.s32.totalorder %s17, 0
    %p165 = por %p163, %p164
    %s166 = ssub.s32 %s18, %s37
    %s167 = ssub.s32 %s19, %s33
    %s168 = sor.u32 %s166, %s167
    %s169 = ssub.s32 %s20, %s29
    %s170 = sor.u32 %s168, %s169
    %p171 = scmp.eq.s32.totalorder %s170, 0
    %s173 = sadd.s32 %s172, 1
    %s174 = scalar_select %p171, %s172, %s173
    %p177 = pneg %p171
    %p178 = scmp.eq.s32.totalorder %s11, 7
    %p179 = por %p177, %p178
    %p180 = scmp.ne.s32.totalorder %s172, %s175
    %p181 = scmp.eq.s32.totalorder %s11, 0
    %p182 = por %p180, %p181
    %p183 = scmp.ne.s32.totalorder %s172, %s175
    %p184 = scmp.eq.s32.totalorder %s16, 7
    %p185 = por %p183, %p184
    %p186 = scmp.ne.s32.totalorder %s175, %s176
    %p187 = scmp.eq.s32.totalorder %s16, 0
    %p188 = por %p186, %p187
    %p189 = scmp.ne.s32.totalorder %s175, %s176
    %p190 = scmp.eq.s32.totalorder %s17, 7
    %p191 = por %p189, %p190
    %p193 = scmp.ne.s32.totalorder %s176, %s192
    %p194 = scmp.eq.s32.totalorder %s17, 0
    %p195 = por %p193, %p194
    %p196 = scmp.le.s32.totalorder 1, %s11
    %p197 = scmp.lt.s32.totalorder %s11, 9
    %p198 = pnand %p196, %p197
    %p199 = pneg %p198
    // Predicated region
    $region9: #{upmix_forward.1} parent=5 // pred_check
      _
    $region10: #{upmix_forward.1} parent=5 // pred_check_branch
      %201 = sbr.rel (%p198) target = $region12
    $region11: #{upmix_forward.1} parent=5 // pred_region
      %s202 = ssub.s32 %s11, 1
      // Predicated region
      $region13: #{upmix_forward.1} parent=11 // pred_check
        %p203 = pneg %p137
      $region14: #{upmix_forward.1} parent=11 // pred_check_branch
        %205 = sbr.rel (%p203) target = $region16
      $region15: #{upmix_forward.1} parent=11 // pred_region
        _
      $region16: #{upmix_forward.1} parent=11 // pred_fallthru
        _
      // Predicated region
      $region17: #{upmix_forward.1} parent=11 // pred_check
        %p206 = pneg %p158
      $region18: #{upmix_forward.1} parent=11 // pred_check_branch
        %208 = sbr.rel (%p206) target = $region20
      $region19: #{upmix_forward.1} parent=11 // pred_region
        _
      $region20: #{upmix_forward.1} parent=11 // pred_fallthru
        _
    $region12: #{upmix_forward.1} parent=5 // pred_fallthru
      _
    %p209 = scmp.lt.s32.totalorder %s11, 8
    // Predicated region
    $region21: #{upmix_forward.1} parent=5 // pred_check
      %p210 = pneg %p209
    $region22: #{upmix_forward.1} parent=5 // pred_check_branch
      %212 = sbr.rel (%p210) target = $region24
    $region23: #{upmix_forward.1} parent=5 // pred_region
      // Predicated region
      $region25: #{upmix_forward.1} parent=23 // pred_check
        %p213 = pneg %p54
      $region26: #{upmix_forward.1} parent=23 // pred_check_branch
        %215 = sbr.rel (%p213) target = $region28
      $region27: #{upmix_forward.1} parent=23 // pred_region
        %p216 = scmp.lt.s32.totalorder %s18, 3
        %s217 = scalar_select %p216, %s18, 3
        %p218 = scmp.lt.s32.totalorder %s19, 1
        %s219 = scalar_select %p218, %s19, 1
        %p220 = scmp.lt.s32.totalorder %s20, 0
        %s221 = scalar_select %p220, %s20, 0
        %s222 = smul.addr %s219, 4
        %s223 = sadd.s32 %s221, %s222
        %s224 = smul.addr %s217, 8
        %s225 = sadd.s32 %s223, %s224
        %s226 = smul.addr %s225, 4
        %s227 = scalar_lea.vmem %s0, %s226
      $region28: #{upmix_forward.1} parent=23 // pred_fallthru
        _
      // Predicated region
      $region29: #{upmix_forward.1} parent=23 // pred_check
        %p228 = pneg %p80
      $region30: #{upmix_forward.1} parent=23 // pred_check_branch
        %230 = sbr.rel (%p228) target = $region32
      $region31: #{upmix_forward.1} parent=23 // pred_region
        %p231 = scmp.lt.s32.totalorder %s18, 3
        %s232 = scalar_select %p231, %s18, 3
        %s233 = smul.addr %s232, 2
        %s234 = scalar_lea.vmem %s1, %s233
      $region32: #{upmix_forward.1} parent=23 // pred_fallthru
        _
      // Predicated region
      $region33: #{upmix_forward.1} parent=23 // pred_check
        %p235 = pneg %p110
      $region34: #{upmix_forward.1} parent=23 // pred_check_branch
        %237 = sbr.rel (%p235) target = $region36
      $region35: #{upmix_forward.1} parent=23 // pred_region
        %p238 = scmp.lt.s32.totalorder %s18, 3
        %s239 = scalar_select %p238, %s18, 3
        %p240 = scmp.lt.s32.totalorder %s19, 1
        %s241 = scalar_select %p240, %s19, 1
        %p242 = scmp.lt.s32.totalorder %s20, 0
        %s243 = scalar_select %p242, %s20, 0
        %s244 = sadd.s32 %s243, %s241
        %s245 = smul.addr %s239, 2
        %s246 = sadd.s32 %s244, %s245
        %s247 = smul.addr %s246, 4
        %s248 = scalar_lea.vmem %s2, %s247
      $region36: #{upmix_forward.1} parent=23 // pred_fallthru
        _
    $region24: #{upmix_forward.1} parent=5 // pred_fallthru
      _
    %p249 = scmp.le.s32.totalorder 1, %s11
    %p250 = scmp.lt.s32.totalorder %s11, 9
    %p251 = pnand %p249, %p250
    %p252 = pneg %p251
    // Predicated region
    $region37: #{upmix_forward.1} parent=5 // pred_check
      _
    $region38: #{upmix_forward.1} parent=5 // pred_check_branch
      %254 = sbr.rel (%p251) target = $region40
    $region39: #{upmix_forward.1} parent=5 // pred_region
      %s255 = ssub.s32 %s11, 1
      %p256 = scmp.lt.s32.totalorder %s21, 3
      %s257 = scalar_select %p256, %s21, 3
      %p258 = scmp.lt.s32.totalorder %s22, 1
      %s259 = scalar_select %p258, %s22, 1
      %p260 = scmp.lt.s32.totalorder %s23, 0
      %s261 = scalar_select %p260, %s23, 0
      %s262 = smul.addr %s259, 4
      %s263 = sadd.s32 %s261, %s262
      %s264 = smul.addr %s257, 8
      %s265 = sadd.s32 %s263, %s264
      %s266 = smul.addr %s265, 4
      %s267 = scalar_lea.vmem %s0, %s266
      %p268 = pneg %p60
      %p269 = pneg %p57
      %p270 = scmp.lt.s32.totalorder %s21, 3
      %s271 = scalar_select %p270, %s21, 3
      %s272 = smul.addr %s271, 2
      %s273 = scalar_lea.vmem %s1, %s272
      %p274 = pneg %p86
      %p275 = pneg %p83
      %p276 = scmp.lt.s32.totalorder %s21, 3
      %s277 = scalar_select %p276, %s21, 3
      %p278 = scmp.lt.s32.totalorder %s22, 1
      %s279 = scalar_select %p278, %s22, 1
      %p280 = scmp.lt.s32.totalorder %s23, 0
      %s281 = scalar_select %p280, %s23, 0
      %s282 = sadd.s32 %s281, %s279
      %s283 = smul.addr %s277, 2
      %s284 = sadd.s32 %s282, %s283
      %s285 = smul.addr %s284, 4
      %s286 = scalar_lea.vmem %s2, %s285
      %p287 = pneg %p116
      %p288 = pneg %p113
      %p289 = pneg %p137
      %p290 = pneg %p134
      %p291 = pneg %p158
      %p292 = pneg %p155
      %p293 = pneg %p188
      %p294 = pneg %p185
      %p295 = scmp.lt.s32.totalorder %s21, 3
      %s296 = scalar_select %p295, %s21, 3
      %p297 = scmp.lt.s32.totalorder %s22, 1
      %s298 = scalar_select %p297, %s22, 1
      %p299 = scmp.lt.s32.totalorder %s23, 0
      %s300 = scalar_select %p299, %s23, 0
      %s301 = sadd.s32 %s300, %s298
      %s302 = smul.addr %s296, 2
      %s303 = sadd.s32 %s301, %s302
      %s304 = smul.addr %s303, 4
      %s305 = scalar_lea.vmem %s5, %s304
      %p306 = scmp.lt.s32.totalorder %s21, 3
      %s307 = scalar_select %p306, %s21, 3
      %p308 = scmp.lt.s32.totalorder %s22, 1
      %s309 = scalar_select %p308, %s22, 1
      %p310 = scmp.lt.s32.totalorder %s23, 0
      %s311 = scalar_select %p310, %s23, 0
      %s312 = smul.addr %s309, 4
      %s313 = sadd.s32 %s311, %s312
      %s314 = smul.addr %s307, 8
      %s315 = sadd.s32 %s313, %s314
      %s316 = smul.addr %s315, 4
      %s317 = scalar_lea.vmem %s0, %s316
      %p318 = scmp.lt.s32.totalorder %s21, 3
      %s319 = scalar_select %p318, %s21, 3
      %s320 = smul.addr %s319, 2
      %s321 = scalar_lea.vmem %s1, %s320
      %p322 = scmp.lt.s32.totalorder %s21, 3
      %s323 = scalar_select %p322, %s21, 3
      %p324 = scmp.lt.s32.totalorder %s22, 1
      %s325 = scalar_select %p324, %s22, 1
      %p326 = scmp.lt.s32.totalorder %s23, 0
      %s327 = scalar_select %p326, %s23, 0
      %s328 = sadd.s32 %s327, %s325
      %s329 = smul.addr %s323, 2
      %s330 = sadd.s32 %s328, %s329
      %s331 = smul.addr %s330, 4
      %s332 = scalar_lea.vmem %s2, %s331
      %p333 = scmp.lt.s32.totalorder %s21, 3
      %s334 = scalar_select %p333, %s21, 3
      %p335 = scmp.lt.s32.totalorder %s22, 1
      %s336 = scalar_select %p335, %s22, 1
      %p337 = scmp.lt.s32.totalorder %s23, 0
      %s338 = scalar_select %p337, %s23, 0
      %s339 = sadd.s32 %s338, %s336
      %s340 = smul.addr %s334, 2
      %s341 = sadd.s32 %s339, %s340
      %s342 = smul.addr %s341, 4
      %s343 = scalar_lea.vmem %s5, %s342
      %v345 = vld [vmem:[%s321] sm:$0x3]
      %v346 = vld [vmem:[%s317] sm:$0xf]
      %v347 = vld [vmem:[%s317 + $0x4] sm:$0xf]
      %v348 = vld [vmem:[%s317 + $0x8] sm:$0xf]
      %v349 = vld [vmem:[%s317 + $0xc] sm:$0xf]
      %v350 = vld [vmem:[%s3] sm:$0xf]
      %352 = vset.pattern.permute.xlu0 0
      %353 = vperm.xlu0 %352, %v350
      %v354 = vpop.permute.xlu0 %353
      %v360 = vunpack.c.l.b16 %v346
      %v361 = vunpack.c.l.b16 %v347
      %v362 = vunpack.c.l.b16 %v348
      %v363 = vunpack.c.l.b16 %v349
      %v364 = vpack.c.b16 %v361, %v360
      %v365 = vpack.c.b16 %v363, %v362
      %vm368 = vcmask 261120
      %v370 = vsel %vm368, %v345, 0
      %372 = vmatpush.bf16.msra.mxu0 0
      %373 = vmatpush.bf16.msra.mxu0 0
      %374 = vmatpush.bf16.msra.mxu0 0
      %375 = vmatpush.bf16.msra.mxu0 0
      %376 = vmatpush.bf16.msra.mxu0 0
      %377 = vmatpush.bf16.msra.mxu0 0
      %378 = vmatpush.bf16.msra.mxu0 %v365
      %379 = vmatpush.bf16.msra.mxu0 %v364
      %380 = vmatmul.bf16.gmra.mxu0 %v370
      %v381 = vpop.f32.mrf.mxu0
      %v382 = vadd.f32 %v354, %v381
      %v383 = vpop.f32.mrf.mxu0
      %384 = vdwg.mxu0
      %v385 = vld [vmem:[%s332] sm:$0xf]
      %v386 = vadd.f32 %v382, %v385
      %vm387 = vcmp.ge.f32.partialorder %v386, 0.0
      %v388 = vld [vmem:[%s4] sm:$0xf]
      %390 = vset.pattern.permute.xlu0 0
      %391 = vperm.xlu0 %390, %v388
      %v392 = vpop.permute.xlu0 %391
      %v394 = vmul.f32 %v392, %v386
      %v395 = vsel %vm387, %v386, %v394
      %396 = vst [vmem:[%s343] sm:$0xf] %v395
      %p397 = scmp.lt.s32.totalorder %s21, 3
      %s398 = scalar_select %p397, %s21, 3
      %p399 = scmp.lt.s32.totalorder %s22, 1
      %s400 = scalar_select %p399, %s22, 1
      %p401 = scmp.lt.s32.totalorder %s23, 0
      %s402 = scalar_select %p401, %s23, 0
      %s403 = sadd.s32 %s402, %s400
      %s404 = smul.addr %s398, 2
      %s405 = sadd.s32 %s403, %s404
      %s406 = smul.addr %s405, 4
      %s407 = scalar_lea.vmem %s5, %s406
      // Predicated region
      $region41: #{upmix_forward.1} parent=39 // pred_check
        %p408 = pneg %p185
      $region42: #{upmix_forward.1} parent=39 // pred_check_branch
        %410 = sbr.rel (%p408) target = $region44
      $region43: #{upmix_forward.1} parent=39 // pred_region
        _
      $region44: #{upmix_forward.1} parent=39 // pred_fallthru
        _
    $region40: #{upmix_forward.1} parent=5 // pred_fallthru
      _
    %p411 = scmp.le.s32.totalorder 2, %s11
    // Predicated region
    $region45: #{upmix_forward.1} parent=5 // pred_check
      %p412 = pneg %p411
    $region46: #{upmix_forward.1} parent=5 // pred_check_branch
      %414 = sbr.rel (%p412) target = $region48
    $region47: #{upmix_forward.1} parent=5 // pred_region
      %s415 = ssub.s32 %s11, 2
      // Predicated region
      $region49: #{upmix_forward.1} parent=47 // pred_check
        %p416 = pneg %p191
      $region50: #{upmix_forward.1} parent=47 // pred_check_branch
        %418 = sbr.rel (%p416) target = $region52
      $region51: #{upmix_forward.1} parent=47 // pred_region
        %p419 = scmp.lt.s32.totalorder %s24, 3
        %s420 = scalar_select %p419, %s24, 3
        %p421 = scmp.lt.s32.totalorder %s25, 1
        %s422 = scalar_select %p421, %s25, 1
        %p423 = scmp.lt.s32.totalorder %s26, 0
        %s424 = scalar_select %p423, %s26, 0
        %s425 = sadd.s32 %s424, %s422
        %s426 = smul.addr %s420, 2
        %s427 = sadd.s32 %s425, %s426
        %s428 = smul.addr %s427, 4
        %s429 = scalar_lea.vmem %s5, %s428
      $region52: #{upmix_forward.1} parent=47 // pred_fallthru
        _
    $region48: #{upmix_forward.1} parent=5 // pred_fallthru
      _
  $region6: #{upmix_forward.1} parent=0 // loop_footer
    %s15 = sadd.s32 1, %s11
  $region7: #{upmix_forward.1} parent=0 // loop_footer_branch
    %10 = sbr.rel target = $region3
  $region8: #{upmix_forward.1} parent=0 // loop_exit
    _

</llo_original>
